<compile_context>
chip_gen: v6e
topology: v6e:2x2x1
jax: 0.10.0
libtpu: 0.0.40
codegen_flags: <defaults>
</compile_context>

<pallas_src>
import functools

import jax
import jax.numpy as jnp
from jax import lax
from jax.experimental import pallas as pl
from jax.experimental.pallas import tpu as pltpu

BN_EPS = 1e-5


# ---------------------------------------------------------------------------
# Generation-aware policy helpers
# ---------------------------------------------------------------------------
def _device_kind():
    try:
        return jax.devices()[0].device_kind.lower()
    except Exception:  # pragma: no cover - defensive
        return ""


def _is_v7():
    kind = _device_kind()
    return ("v7" in kind) or ("7x" in kind)


def _mxu_granularity():
    """Tile/padding granularity: 256 on v6e/v7x (2x256^2 MXU), 128 otherwise (v5e 4x128^2)."""
    kind = _device_kind()
    return 256 if ("v6" in kind or _is_v7()) else 128


def _vmem_limit_bytes():
    """v7x has only 64 MiB physical VMEM per TC -> leave headroom; v5e/v6e have 128 MiB."""
    return (48 if _is_v7() else 96) * 1024 * 1024


def _round_up(x, m):
    return ((x + m - 1) // m) * m


def _largest_divisor_tile(dim, gran, cap):
    """Largest multiple of `gran` that divides `dim` and is <= cap (dim % gran == 0)."""
    t = min(cap, dim)
    t = max((t // gran) * gran, gran)
    while dim % t != 0:
        t -= gran
    return t


# ---------------------------------------------------------------------------
# Kernel
# ---------------------------------------------------------------------------
def mlp_block_kernel(x_ref, w_ref, g_ref, beta_ref, o_ref, acc_ref=None, *,
                     tk, x_resident):
    k = pl.program_id(1)
    # If no scratch was allocated the (f32) output block itself is the resident accumulator.
    acc = acc_ref if acc_ref is not None else o_ref

    @pl.when(k == 0)
    def _init():
        acc[...] = jnp.zeros_like(acc)

    # Linear partial product: x(B, TK) contracted with w(TN, TK) on K (transposed RHS),
    # bf16 (or f32) inputs straight from VMEM, f32 accumulation on the MXU.
    if x_resident:
        start = pl.multiple_of(k * tk, tk)
        x = x_ref[:, pl.ds(start, tk)]
    else:
        x = x_ref[...]

    acc[...] += lax.dot_general(
        x, w_ref[...],
        dimension_numbers=(((1,), (1,)), ((), ())),
        preferred_element_type=jnp.float32,
    )

    # Epilogue at the last K step: BatchNorm1d (training-mode batch stats over the full
    # batch, which lives entirely in this block) + affine + ReLU, fused, single store.
    # Two-pass variance on purpose (no E[y^2]-mean^2 cancellation risk).
    @pl.when(k == pl.num_programs(1) - 1)
    def _epilogue():
        y = acc[...]                                       # (B, TN) f32
        inv_b = 1.0 / y.shape[0]
        mean = jnp.sum(y, axis=0, keepdims=True) * inv_b   # XLU sublane reduce
        centered = y - mean
        var = jnp.sum(centered * centered, axis=0, keepdims=True) * inv_b
        out = centered * lax.rsqrt(var + BN_EPS) * g_ref[...] + beta_ref[...]
        o_ref[...] = jnp.maximum(out, 0.0).astype(o_ref.dtype)


# ---------------------------------------------------------------------------
# Wrapper
# ---------------------------------------------------------------------------
def mlp_block(x, weight, bias, gamma, beta, *, matmul_dtype=jnp.bfloat16):
    """x: (B, D_in); weight: (D_out, D_in); bias/gamma/beta: (D_out,). Returns (B, D_out).

    Set matmul_dtype=jnp.float32 for bit-closer parity with the fp32 PyTorch module.
    """
    # nn.Linear's bias is cancelled exactly by training-mode BatchNorm's batch-mean
    # subtraction, so it is never streamed to the kernel. (Must be reinstated if this
    # kernel is ever reused with eval-mode / running-stats BN.)
    del bias

    B, D_in = x.shape
    D_out = weight.shape[0]
    gran = _mxu_granularity()

    # Lane-dense padding to the MXU granularity (zeros contribute 0 to the matmul; padded
    # output columns have gamma=0 / beta=0 and are sliced off below).
    D_in_p = _round_up(D_in, gran)
    D_out_p = _round_up(D_out, gran)
    if D_in_p != D_in:
        x = jnp.pad(x, ((0, 0), (0, D_in_p - D_in)))
        weight = jnp.pad(weight, ((0, 0), (0, D_in_p - D_in)))
    if D_out_p != D_out:
        weight = jnp.pad(weight, ((0, D_out_p - D_out), (0, 0)))
        gamma = jnp.pad(gamma, (0, D_out_p - D_out))
        beta = jnp.pad(beta, (0, D_out_p - D_out))

    out_dtype = x.dtype
    # Feed the MXU its dtype straight from HBM (in production the weight should already be
    # stored in matmul_dtype so this cast folds into the parameter store).
    x_mm = x.astype(matmul_dtype)
    w_mm = weight.astype(matmul_dtype)
    g2 = gamma.reshape(1, D_out_p).astype(jnp.float32)
    be2 = beta.reshape(1, D_out_p).astype(jnp.float32)

    mm_sz = jnp.dtype(matmul_dtype).itemsize
    out_sz = jnp.dtype(out_dtype).itemsize
    vmem_limit = _vmem_limit_bytes()
    vmem_budget = int(0.75 * vmem_limit)        # headroom for compiler scratch / sems

    # --- N tile: MXU-granular, and on v7x split so both TensorCores get work. ---
    TN = _largest_divisor_tile(D_out_p, gran, 512)
    if _is_v7() and (D_out_p // TN) < 2 and D_out_p >= 2 * gran:
        TN = _largest_divisor_tile(D_out_p, gran, D_out_p // 2)

    # --- Explicit VMEM footprint -> x residency decision and K tile size. ---
    acc_in_out = (out_dtype == jnp.float32)     # accumulate directly in the output block
    fixed = 2 * B * TN * out_sz + 4 * TN * 4    # output double-buffer + gamma/beta
    if not acc_in_out:
        fixed += B * TN * 4                     # f32 accumulator scratch

    x_resident_bytes = 2 * B * D_in_p * mm_sz   # conservative (assume double-buffered)
    per_tk_w = 2 * TN * mm_sz                   # weight double-buffer, per K element
    per_tk_x = 2 * B * mm_sz                    # x stream double-buffer, per K element

    x_resident = (fixed + x_resident_bytes + per_tk_w * gran) <= vmem_budget
    if x_resident:
        fixed += x_resident_bytes
        per_tk = per_tk_w
    else:
        per_tk = per_tk_w + per_tk_x

    tk_cap = (vmem_budget - fixed) // per_tk
    if tk_cap < gran:
        # TODO(synk): add a two-pass / partial-statistics BatchNorm path with a batch grid
        # axis for batches too large to keep resident in VMEM.
        raise ValueError(
            f"MLPBlock Pallas kernel: batch {B} x tile {TN} does not fit the "
            f"{vmem_budget // (1024 * 1024)} MiB VMEM budget on this TPU generation.")
    TK = _largest_divisor_tile(D_in_p, gran, min(int(tk_cap), D_in_p))

    grid = (D_out_p // TN, D_in_p // TK)        # (parallel N, arbitrary K-reduction last)

    if x_resident:
        x_spec = pl.BlockSpec((B, D_in_p), lambda n, k: (0, 0))   # fetched once, resident
    else:
        x_spec = pl.BlockSpec((B, TK), lambda n, k: (0, k))       # K-tiled stream

    kernel = functools.partial(mlp_block_kernel, tk=TK, x_resident=x_resident)
    scratch_shapes = [] if acc_in_out else [pltpu.VMEM((B, TN), jnp.float32)]

    out = pl.pallas_call(
        kernel,
        out_shape=jax.ShapeDtypeStruct((B, D_out_p), out_dtype),
        grid_spec=pltpu.PrefetchScalarGridSpec(
            num_scalar_prefetch=0,
            grid=grid,
            in_specs=[
                x_spec,                                           # x
                pl.BlockSpec((TN, TK), lambda n, k: (n, k)),      # weight (D_out, D_in)
                pl.BlockSpec((1, TN), lambda n, k: (0, n)),       # gamma
                pl.BlockSpec((1, TN), lambda n, k: (0, n)),       # beta
            ],
            out_specs=pl.BlockSpec((B, TN), lambda n, k: (0, n)),
            scratch_shapes=scratch_shapes,
        ),
        compiler_params=pltpu.CompilerParams(
            dimension_semantics=("parallel", "arbitrary"),
            vmem_limit_bytes=vmem_limit,
        ),
    )(x_mm, w_mm, g2, be2)

    return out[:, :D_out]


# ---------------------------------------------------------------------------
# Demo / self-test
# ---------------------------------------------------------------------------
if __name__ == "__main__":
    key = jax.random.PRNGKey(0)
    k_x, k_w, k_b = jax.random.split(key, 3)

    # Small shapes consistent with MLPBlock(input_dim, output_dim).
    B, D_in, D_out = 8, 16, 32

    x = jax.random.normal(k_x, (B, D_in), dtype=jnp.float32)

    # Deterministic parameter init (mirrors nn.Linear uniform init; BN gamma=1, beta=0).
    bound = 1.0 / jnp.sqrt(jnp.float32(D_in))
    weight = jax.random.uniform(k_w, (D_out, D_in), minval=-bound, maxval=bound,
                                dtype=jnp.float32)
    bias = jax.random.uniform(k_b, (D_out,), minval=-bound, maxval=bound,
                              dtype=jnp.float32)
    gamma = jnp.ones((D_out,), dtype=jnp.float32)
    beta = jnp.zeros((D_out,), dtype=jnp.float32)

    md = jnp.bfloat16   # default policy: bf16 MXU inputs on all generations, f32 accumulate
    out = mlp_block(x, weight, bias, gamma, beta, matmul_dtype=md)
    out = jax.block_until_ready(out)

    # Pure-JAX reference with the same matmul input dtype (f32 accumulation, f32 BN).
    # The bias IS included here: training-mode BatchNorm cancels it, which also validates
    # the kernel's bias-free formulation.
    y = jnp.dot(x.astype(md), weight.astype(md).T,
                preferred_element_type=jnp.float32) + bias
    mean = jnp.mean(y, axis=0, keepdims=True)
    var = jnp.mean((y - mean) ** 2, axis=0, keepdims=True)
    ref = jnp.maximum((y - mean) / jnp.sqrt(var + BN_EPS) * gamma + beta, 0.0)

    tol = 1e-5 if md == jnp.float32 else 2e-2
    assert out.shape == (B, D_out), f"bad output shape {out.shape}"
    assert jnp.allclose(out, ref, atol=tol, rtol=tol), "mismatch vs reference"

    print("KERNEL_OK")
</pallas_src>

<mosaic_0001>
module attributes {stable_mosaic.version = 11 : i64} {
  func.func @mlp_block_kernel(%arg0: i32, %arg1: i32, %arg2: memref<8x128xbf16, #tpu.memory_space<vmem>>, %arg3: memref<128x128xbf16, #tpu.memory_space<vmem>>, %arg4: memref<1x128xf32, #tpu.memory_space<vmem>>, %arg5: memref<1x128xf32, #tpu.memory_space<vmem>>, %arg6: memref<8x128xf32, #tpu.memory_space<vmem>>) attributes {dimension_semantics = [#tpu.dimension_semantics<parallel>, #tpu.dimension_semantics<arbitrary>], iteration_bounds = array<i64: 1, 1>, scalar_prefetch = 0 : i64, scratch_operands = 0 : i64, tpu.core_type = #tpu.core_type<tc>, window_params = [{pipeline_mode = #tpu.pipeline_mode<synchronous>, transform_indices = @transform_0, window_bounds = array<i64: 8, 128>}, {transform_indices = @transform_1, window_bounds = array<i64: 128, 128>}, {transform_indices = @transform_2, window_bounds = array<i64: 1, 128>}, {transform_indices = @transform_3, window_bounds = array<i64: 1, 128>}, {transform_indices = @transform_4, window_bounds = array<i64: 8, 128>}]} {
    %c0_i32 = arith.constant 0 : i32
    %0 = arith.cmpi eq, %arg1, %c0_i32 : i32
    %1 = arith.extui %0 : i1 to i32
    %c0_i32_0 = arith.constant 0 : i32
    %2 = arith.cmpi ne, %1, %c0_i32_0 : i32
    scf.if %2 {
      %cst_9 = arith.constant 0.000000e+00 : f32
      %15 = vector.broadcast %cst_9 : f32 to vector<8x128xf32>
      %c0_10 = arith.constant 0 : index
      %c0_11 = arith.constant 0 : index
      %16 = vector.load %arg6[%c0_10, %c0_11] : memref<8x128xf32, #tpu.memory_space<vmem>>, vector<8x128xf32>
      tpu.vector_store %arg6[%c0_10, %c0_11], %15 {strides = array<i32>} : memref<8x128xf32, #tpu.memory_space<vmem>>, vector<8x128xf32>,
    } else {
    }
    %c128_i32 = arith.constant 128 : i32
    %3 = arith.muli %arg1, %c128_i32 : i32
    %4 = tpu.assume_multiple %3, 128 : i32
    %c0 = arith.constant 0 : index
    %5 = arith.index_cast %4 : i32 to index
    %6 = vector.load %arg2[%c0, %5] : memref<8x128xbf16, #tpu.memory_space<vmem>>, vector<8x128xbf16>
    %c0_1 = arith.constant 0 : index
    %c0_2 = arith.constant 0 : index
    %7 = vector.load %arg6[%c0_1, %c0_2] : memref<8x128xf32, #tpu.memory_space<vmem>>, vector<8x128xf32>
    %c0_3 = arith.constant 0 : index
    %c0_4 = arith.constant 0 : index
    %8 = vector.load %arg3[%c0_3, %c0_4] : memref<128x128xbf16, #tpu.memory_space<vmem>>, vector<128x128xbf16>
    %cst = arith.constant dense<0.000000e+00> : vector<8x128xf32>
    %9 = tpu.matmul %6, %8, %cst {dimension_numbers = #tpu.dot_dimension_numbers<[1], [1], [0], [0], [0, 0, 1, 0], [], []>} : vector<8x128xbf16>, vector<128x128xbf16>, vector<8x128xf32> -> vector<8x128xf32>
    %10 = arith.addf %7, %9 : vector<8x128xf32>
    %c0_5 = arith.constant 0 : index
    %c0_6 = arith.constant 0 : index
    %11 = vector.load %arg6[%c0_5, %c0_6] : memref<8x128xf32, #tpu.memory_space<vmem>>, vector<8x128xf32>
    tpu.vector_store %arg6[%c0_5, %c0_6], %10 {strides = array<i32>} : memref<8x128xf32, #tpu.memory_space<vmem>>, vector<8x128xf32>,
    %c0_i32_7 = arith.constant 0 : i32
    %12 = arith.cmpi eq, %arg1, %c0_i32_7 : i32
    %13 = arith.extui %12 : i1 to i32
    %c0_i32_8 = arith.constant 0 : i32
    %14 = arith.cmpi ne, %13, %c0_i32_8 : i32
    scf.if %14 {
      %c0_9 = arith.constant 0 : index
      %c0_10 = arith.constant 0 : index
      %15 = vector.load %arg6[%c0_9, %c0_10] : memref<8x128xf32, #tpu.memory_space<vmem>>, vector<8x128xf32>
      %cst_11 = arith.constant dense<0.000000e+00> : vector<128xf32>
      %16 = vector.multi_reduction <add>, %15, %cst_11 [0] : vector<8x128xf32> to vector<128xf32>
      %17 = vector.shape_cast %16 : vector<128xf32> to vector<1x128xf32>
      %cst_12 = arith.constant 1.250000e-01 : f32
      %18 = vector.broadcast %cst_12 : f32 to vector<1x128xf32>
      %19 = arith.mulf %17, %18 : vector<1x128xf32>
      %20 = vector.broadcast %19 : vector<1x128xf32> to vector<8x128xf32>
      %21 = arith.subf %15, %20 : vector<8x128xf32>
      %22 = arith.mulf %21, %21 : vector<8x128xf32>
      %cst_13 = arith.constant dense<0.000000e+00> : vector<128xf32>
      %23 = vector.multi_reduction <add>, %22, %cst_13 [0] : vector<8x128xf32> to vector<128xf32>
      %24 = vector.shape_cast %23 : vector<128xf32> to vector<1x128xf32>
      %cst_14 = arith.constant 1.250000e-01 : f32
      %25 = vector.broadcast %cst_14 : f32 to vector<1x128xf32>
      %26 = arith.mulf %24, %25 : vector<1x128xf32>
      %cst_15 = arith.constant 9.99999974E-6 : f32
      %27 = vector.broadcast %cst_15 : f32 to vector<1x128xf32>
      %28 = arith.addf %26, %27 : vector<1x128xf32>
      %29 = math.rsqrt %28 : vector<1x128xf32>
      %30 = vector.broadcast %29 : vector<1x128xf32> to vector<8x128xf32>
      %31 = arith.mulf %21, %30 : vector<8x128xf32>
      %c0_16 = arith.constant 0 : index
      %c0_17 = arith.constant 0 : index
      %32 = vector.load %arg4[%c0_16, %c0_17] : memref<1x128xf32, #tpu.memory_space<vmem>>, vector<1x128xf32>
      %33 = vector.broadcast %32 : vector<1x128xf32> to vector<8x128xf32>
      %34 = arith.mulf %31, %33 : vector<8x128xf32>
      %c0_18 = arith.constant 0 : index
      %c0_19 = arith.constant 0 : index
      %35 = vector.load %arg5[%c0_18, %c0_19] : memref<1x128xf32, #tpu.memory_space<vmem>>, vector<1x128xf32>
      %36 = vector.broadcast %35 : vector<1x128xf32> to vector<8x128xf32>
      %37 = arith.addf %34, %36 : vector<8x128xf32>
      %cst_20 = arith.constant 0.000000e+00 : f32
      %38 = vector.broadcast %cst_20 : f32 to vector<8x128xf32>
      %39 = arith.maximumf %37, %38 : vector<8x128xf32>
      %c0_21 = arith.constant 0 : index
      %c0_22 = arith.constant 0 : index
      %40 = vector.load %arg6[%c0_21, %c0_22] : memref<8x128xf32, #tpu.memory_space<vmem>>, vector<8x128xf32>
      tpu.vector_store %arg6[%c0_21, %c0_22], %39 {strides = array<i32>} : memref<8x128xf32, #tpu.memory_space<vmem>>, vector<8x128xf32>,
    } else {
    }
    return
  }
  func.func @transform_0(%arg0: i32, %arg1: i32) -> (i32, i32) {
    %c0_i32 = arith.constant 0 : i32
    %c0_i32_0 = arith.constant 0 : i32
    %c0_i32_1 = arith.constant 0 : i32
    return %c0_i32, %c0_i32_0 : i32, i32
  }
  func.func @transform_1(%arg0: i32, %arg1: i32) -> (i32, i32) {
    %c0_i32 = arith.constant 0 : i32
    return %arg0, %arg1 : i32, i32
  }
  func.func @transform_2(%arg0: i32, %arg1: i32) -> (i32, i32) {
    %c0_i32 = arith.constant 0 : i32
    %c0_i32_0 = arith.constant 0 : i32
    return %c0_i32, %arg0 : i32, i32
  }
  func.func @transform_3(%arg0: i32, %arg1: i32) -> (i32, i32) {
    %c0_i32 = arith.constant 0 : i32
    %c0_i32_0 = arith.constant 0 : i32
    return %c0_i32, %arg0 : i32, i32
  }
  func.func @transform_4(%arg0: i32, %arg1: i32) -> (i32, i32) {
    %c0_i32 = arith.constant 0 : i32
    %c0_i32_0 = arith.constant 0 : i32
    return %c0_i32, %arg0 : i32, i32
  }
}

</mosaic_0001>

<llo_original>
// kernel: tpu_custom_call.1
$region0: #{tpu_custom_call.1}
  #allocation0 [shape = 'u32[]', space=smem, size = 0x4, offset = 0x4, fixed_abs, tag = 'smem constant byte address 0x4 - core index']
  #allocation1 [shape = 'u32[144,128]{1,0:T(1,128)}', space=vmem, size = 0x12000, scoped, tag = 'internal scratch']
  %s0 = inlined_call_operand.hbm [shape: bf16[8,128], index: 0, kind: input, shape index: {}]
  %s1 = inlined_call_operand.hbm [shape: bf16[128,128], index: 1, kind: input, shape index: {}]
  %s2 = inlined_call_operand.vmem [shape: f32[1,128], index: 2, kind: input, shape index: {}]
  %s3 = inlined_call_operand.vmem [shape: f32[1,128], index: 3, kind: input, shape index: {}]
  %s4 = inlined_call_operand.hbm [shape: f32[8,128], index: 4, kind: output, shape index: {}]
  %s5 = sld [smem:[#allocation0]]
  $region42: #{tpu_custom_call.1} parent=0
    _
  %s7 = ssub.s32 1, %s5
  %s8 = scalar_select 0, %s7, %s5
  $region1: #{tpu_custom_call.1} parent=0
    #allocation2 [shape = 'u8[2048]{0}', space=vmem, size = 0x800, scoped, tag = 'input window, operand 0, single buffered']
    #allocation3 [shape = 's32[1]{0}', space=sflag, size = 0x4, scoped, tag = 'scoped memory for tpu_custom_call.1']
    #allocation4 [shape = 's32[1]{0}', space=sflag, size = 0x4, scoped, tag = 'scoped memory for tpu_custom_call.1']
    #allocation5 [shape = 'u8[32768]{0}', space=vmem, size = 0x8000, scoped, tag = 'input window, operand 1, single buffered']
    #allocation6 [shape = 's32[1]{0}', space=sflag, size = 0x4, scoped, tag = 'scoped memory for tpu_custom_call.1']
    #allocation7 [shape = 'u8[4096]{0}', space=vmem, size = 0x1000, scoped, tag = 'output window, operand 0, single buffered']
    %9 = vsyncpa [#allocation3], 0
    %10 = vsyncpa [#allocation6], 0
    %11 = vsyncpa [#allocation4], 0
    // Predicated region
    $region2: #{tpu_custom_call.1} parent=1 // pred_check
      _
    $region3: #{tpu_custom_call.1} parent=1 // pred_check_branch
      %13 = sbr.rel (0) target = $region5
    $region4: #{tpu_custom_call.1} parent=1 // pred_region
      %s15 = ssub.s32 64, 64
      %16 = vsyncadd [#allocation3], %s15
      %s18 = sshll.u32 [#allocation2], 4
      %s19 = int_to_ptr.vmem [resolvable:$true] %s18
      %21 = dma.hbm_to_vmem [thread:$0]  %s0, 64, %s19, [#allocation3]
    $region5: #{tpu_custom_call.1} parent=1 // pred_fallthru
      _
    // Predicated region
    $region6: #{tpu_custom_call.1} parent=1 // pred_check
      _
    $region7: #{tpu_custom_call.1} parent=1 // pred_check_branch
      %23 = sbr.rel (0) target = $region9
    $region8: #{tpu_custom_call.1} parent=1 // pred_region
      %s25 = ssub.s32 1024, 1024
      %26 = vsyncadd [#allocation6], %s25
      %s27 = sshll.u32 [#allocation5], 4
      %s28 = int_to_ptr.vmem [resolvable:$true] %s27
      %33 = dma.hbm_to_vmem [thread:$0]  %s1, 1024, %s28, [#allocation6], 64, 64, 4
    $region9: #{tpu_custom_call.1} parent=1 // pred_fallthru
      _
    // Predicated region
    $region10: #{tpu_custom_call.1} parent=1 // pred_check
      _
    $region11: #{tpu_custom_call.1} parent=1 // pred_check_branch
      %35 = sbr.rel (0) target = $region13
    $region12: #{tpu_custom_call.1} parent=1 // pred_region
      _
    $region13: #{tpu_custom_call.1} parent=1 // pred_fallthru
      _
    // Predicated region
    $region14: #{tpu_custom_call.1} parent=1 // pred_check
      _
    $region15: #{tpu_custom_call.1} parent=1 // pred_check_branch
      %37 = sbr.rel (0) target = $region17
    $region16: #{tpu_custom_call.1} parent=1 // pred_region
      _
    $region17: #{tpu_custom_call.1} parent=1 // pred_fallthru
      _
    // Predicated region
    $region18: #{tpu_custom_call.1} parent=1 // pred_check
      _
    $region19: #{tpu_custom_call.1} parent=1 // pred_check_branch
      %39 = sbr.rel (0) target = $region21
    $region20: #{tpu_custom_call.1} parent=1 // pred_region
      %40 = dma.done [#allocation3], 64
    $region21: #{tpu_custom_call.1} parent=1 // pred_fallthru
      _
    // Predicated region
    $region22: #{tpu_custom_call.1} parent=1 // pred_check
      _
    $region23: #{tpu_custom_call.1} parent=1 // pred_check_branch
      %42 = sbr.rel (0) target = $region25
    $region24: #{tpu_custom_call.1} parent=1 // pred_region
      %43 = dma.done [#allocation6], 1024
    $region25: #{tpu_custom_call.1} parent=1 // pred_fallthru
      _
    %p45 = scmp.eq.s32.totalorder 0, 0
    // Predicated region
    $region26: #{tpu_custom_call.1} parent=1 // pred_check
      %p46 = pneg %p45
    $region27: #{tpu_custom_call.1} parent=1 // pred_check_branch
      %48 = sbr.rel (%p46) target = $region29
    $region28: #{tpu_custom_call.1} parent=1 // pred_region
      %49 = vst [vmem:[#allocation7] sm:$0xff] 0.0
    $region29: #{tpu_custom_call.1} parent=1 // pred_fallthru
      _
    %s50 = smul.u32 0, 128
    %s51 = sshra.s32 %s50, 7
    %s52 = sand.u32 %s50, 127
    %s53 = smul.addr %s51, 4
    %s54 = scalar_lea.vmem [#allocation2], %s53
    %v55 = vld [vmem:[%s54] sm:$0xf]
    %v56 = vld [vmem:[#allocation7] sm:$0xff]
    %v57 = vld [vmem:[#allocation5] sm:$0xf]
    %v58 = vld [vmem:[#allocation5 + $0x4] sm:$0xf]
    %v59 = vld [vmem:[#allocation5 + $0x8] sm:$0xf]
    %v60 = vld [vmem:[#allocation5 + $0xc] sm:$0xf]
    %v61 = vld [vmem:[#allocation5 + $0x10] sm:$0xf]
    %v62 = vld [vmem:[#allocation5 + $0x14] sm:$0xf]
    %v63 = vld [vmem:[#allocation5 + $0x18] sm:$0xf]
    %v64 = vld [vmem:[#allocation5 + $0x1c] sm:$0xf]
    %v65 = vld [vmem:[#allocation5 + $0x20] sm:$0xf]
    %v66 = vld [vmem:[#allocation5 + $0x24] sm:$0xf]
    %v67 = vld [vmem:[#allocation5 + $0x28] sm:$0xf]
    %v68 = vld [vmem:[#allocation5 + $0x2c] sm:$0xf]
    %v69 = vld [vmem:[#allocation5 + $0x30] sm:$0xf]
    %v70 = vld [vmem:[#allocation5 + $0x34] sm:$0xf]
    %v71 = vld [vmem:[#allocation5 + $0x38] sm:$0xf]
    %v72 = vld [vmem:[#allocation5 + $0x3c] sm:$0xf]
    %v89 = vunpack.c.l.b16 %v57
    %v90 = vunpack.c.l.b16 %v58
    %v91 = vunpack.c.l.b16 %v59
    %v92 = vunpack.c.l.b16 %v60
    %v93 = vunpack.c.l.b16 %v61
    %v94 = vunpack.c.l.b16 %v62
    %v95 = vunpack.c.l.b16 %v63
    %v96 = vunpack.c.l.b16 %v64
    %v97 = vunpack.c.l.b16 %v65
    %v98 = vunpack.c.l.b16 %v66
    %v99 = vunpack.c.l.b16 %v67
    %v100 = vunpack.c.l.b16 %v68
    %v101 = vunpack.c.l.b16 %v69
    %v102 = vunpack.c.l.b16 %v70
    %v103 = vunpack.c.l.b16 %v71
    %v104 = vunpack.c.l.b16 %v72
    %v105 = vpack.c.b16 %v90, %v89
    %v106 = vpack.c.b16 %v92, %v91
    %v107 = vpack.c.b16 %v94, %v93
    %v108 = vpack.c.b16 %v96, %v95
    %v109 = vpack.c.b16 %v98, %v97
    %v110 = vpack.c.b16 %v100, %v99
    %v111 = vpack.c.b16 %v102, %v101
    %v112 = vpack.c.b16 %v104, %v103
    %121 = vmatprep.subr.bf16.mxu0 0
    %122 = vmatpush1.bf16.xpose.msra.mxu0 %v112
    %123 = vmatprep.subr.bf16.mxu0 0
    %124 = vmatpush1.bf16.xpose.msra.mxu0 %v111
    %125 = vmatprep.subr.bf16.mxu0 0
    %126 = vmatpush1.bf16.xpose.msra.mxu0 %v110
    %127 = vmatprep.subr.bf16.mxu0 0
    %128 = vmatpush1.bf16.xpose.msra.mxu0 %v109
    %129 = vmatprep.subr.bf16.mxu0 0
    %130 = vmatpush1.bf16.xpose.msra.mxu0 %v108
    %131 = vmatprep.subr.bf16.mxu0 0
    %132 = vmatpush1.bf16.xpose.msra.mxu0 %v107
    %133 = vmatprep.subr.bf16.mxu0 0
    %134 = vmatpush1.bf16.xpose.msra.mxu0 %v106
    %135 = vmatprep.subr.bf16.mxu0 0
    %136 = vmatpush1.bf16.xpose.msra.mxu0 %v105
    %137 = vmatprep.subr.bf16.mxu0 0
    %138 = vmatpush2.bf16.xpose.msra.mxu0 0
    %139 = vmatprep.subr.bf16.mxu0 0
    %140 = vmatpush2.bf16.xpose.msra.mxu0 0
    %141 = vmatprep.subr.bf16.mxu0 0
    %142 = vmatpush2.bf16.xpose.msra.mxu0 0
    %143 = vmatprep.subr.bf16.mxu0 0
    %144 = vmatpush2.bf16.xpose.msra.mxu0 0
    %145 = vmatprep.subr.bf16.mxu0 0
    %146 = vmatpush2.bf16.xpose.msra.mxu0 0
    %147 = vmatprep.subr.bf16.mxu0 0
    %148 = vmatpush2.bf16.xpose.msra.mxu0 0
    %149 = vmatprep.subr.bf16.mxu0 0
    %150 = vmatpush2.bf16.xpose.msra.mxu0 0
    %151 = vmatprep.subr.bf16.mxu0 0
    %152 = vmatpush2.bf16.xpose.msra.mxu0 0
    %153 = vmatprep.mubr.bf16.mxu0 0
    %154 = vmatmul.mubr.bf16.gmra.mxu0 %v55
    %v155 = vpop.f32.mrf.mxu0
    %v156 = vadd.f32 0.0, %v155
    %v157 = vpop.f32.mrf.mxu0
    %v158 = vpop.f32.mrf.mxu0
    %v159 = vpop.f32.mrf.mxu0
    %160 = vdwg.mxu0
    %v161 = vadd.f32 %v56, %v156
    %162 = vst [vmem:[#allocation7] sm:$0xff] %v161
    // Predicated region
    $region30: #{tpu_custom_call.1} parent=1 // pred_check
      %p163 = pneg %p45
    $region31: #{tpu_custom_call.1} parent=1 // pred_check_branch
      %165 = sbr.rel (%p163) target = $region33
    $region32: #{tpu_custom_call.1} parent=1 // pred_region
      %v166 = vld [vmem:[#allocation7] sm:$0xff]
      %v167 = vrot.slane %v166, 4
      %v168 = vadd.f32 %v166, %v167
      %v169 = vrot.slane %v168, 2
      %v170 = vadd.f32 %v168, %v169
      %v171 = vrot.slane %v170, 1
      %v172 = vadd.f32 %v170, %v171
      %v173 = vmul.f32 %v172, 0.125
      %v174 = vsub.f32 %v166, %v173
      %v175 = vmul.f32 %v174, %v174
      %v176 = vrot.slane %v175, 4
      %v177 = vadd.f32 %v175, %v176
      %v178 = vrot.slane %v177, 2
      %v179 = vadd.f32 %v177, %v178
      %v180 = vrot.slane %v179, 1
      %v181 = vadd.f32 %v179, %v180
      %v182 = vmul.f32 %v181, 0.125
      %v183 = vadd.f32 %v182, 1e-05
      %v184 = vrsqrt.pop %v183
      %v185 = vmul.f32 %v174, %v184
      %v186 = vld [vmem:[%s2] sm:$0x1]
      %v188 = vlaneseq
      %v189 = vshrl.u32 %v188, 7
      %v190 = vsub.s32 0, %v189
      %v191 = vrot.slane %v186, %v190
      %v193 = vmul.f32 %v185, %v191
      %v194 = vld [vmem:[%s3] sm:$0x1]
      %v196 = vlaneseq
      %v197 = vshrl.u32 %v196, 7
      %v198 = vsub.s32 0, %v197
      %v199 = vrot.slane %v194, %v198
      %v201 = vadd.f32 %v193, %v199
      %v202 = vmax.f32 %v201, 0.0
      %203 = vst [vmem:[#allocation7] sm:$0xff] %v202
    $region33: #{tpu_custom_call.1} parent=1 // pred_fallthru
      _
    // Predicated region
    $region34: #{tpu_custom_call.1} parent=1 // pred_check
      _
    $region35: #{tpu_custom_call.1} parent=1 // pred_check_branch
      %205 = sbr.rel (0) target = $region37
    $region36: #{tpu_custom_call.1} parent=1 // pred_region
      %s207 = ssub.s32 128, 128
      %208 = vsyncadd [#allocation4], %s207
      %s210 = sshll.u32 [#allocation7], 4
      %s211 = int_to_ptr.vmem [resolvable:$true] %s210
      %213 = dma.vmem_to_hbm [thread:$0]  %s211, 128, %s4, [#allocation4]
    $region37: #{tpu_custom_call.1} parent=1 // pred_fallthru
      _
    // Predicated region
    $region38: #{tpu_custom_call.1} parent=1 // pred_check
      _
    $region39: #{tpu_custom_call.1} parent=1 // pred_check_branch
      %215 = sbr.rel (0) target = $region41
    $region40: #{tpu_custom_call.1} parent=1 // pred_region
      %216 = dma.done [#allocation4], 128
    $region41: #{tpu_custom_call.1} parent=1 // pred_fallthru
      _
    %217 = vsyncpa [#allocation3], 1
    %218 = vsyncpa [#allocation6], 1
    %219 = vsyncpa [#allocation4], 1

</llo_original>
